<compile_context>
chip_gen: v7x
topology: tpu7x:2x2x1
jax: 0.10.0
libtpu: 0.0.40
codegen_flags: <defaults>
</compile_context>

<pallas_src>
import jax
import jax.numpy as jnp
from jax import lax
from jax.experimental import pallas as pl
from jax.experimental.pallas import tpu as pltpu

LANE = 128
SUBLANE = 8
TARGET_TILE_BYTES = 4 << 20   # ~4 MiB per input tile per buffer
CHUNK_ROWS = 1024             # inner-loop chunk (bounds live ranges in VMEM/vregs)


def _round_up(x: int, m: int) -> int:
    return (x + m - 1) // m * m


def _num_tensorcores() -> int:
    """2 on v7x (2 TensorCores/chip), else 1.  Defensive: default to 1."""
    try:
        kind = jax.devices()[0].device_kind.lower()
        if "v7" in kind or "7x" in kind:
            return 2
    except Exception:
        pass
    return 1


def _largest_divisor(n: int, mult: int, cap: int) -> int:
    """Largest multiple of `mult` that divides `n` and is <= cap."""
    best = mult
    c = mult
    while c <= min(cap, n):
        if n % c == 0:
            best = c
        c += mult
    return best


def _make_kernel(tile_rows: int, chunk_rows: int, data_rows: int,
                 tiles_per_core: int, scalar_label: bool):
    n_chunks = tile_rows // chunk_rows

    def kernel(score_ref, label_ref, out_ref):
        c = pl.program_id(0)
        t = pl.program_id(1)

        # Output block is resident across the reduction axis t: zero at t==0,
        # accumulate directly into it (no scratch, no final copy).
        @pl.when(t == 0)
        def _():
            out_ref[...] = jnp.zeros_like(out_ref)

        # Logical (unclamped) tile index.  The index_map may clamp duplicate /
        # rounded-up tiles onto a valid block; the row mask below zeroes their
        # contribution (and also zeroes undefined rows of a ragged last tile).
        tile_row0 = (c * tiles_per_core + t) * tile_rows

        if scalar_label:
            lab = label_ref[0].astype(jnp.float32)   # SMEM scalar

        def chunk_body(i, acc):
            r0 = pl.multiple_of(i * chunk_rows, chunk_rows)
            s = score_ref[pl.ds(r0, chunk_rows), :].astype(jnp.float32)
            if scalar_label:
                l = lab
            else:
                l = label_ref[pl.ds(r0, chunk_rows), :].astype(jnp.float32)
            # label*(s-1)^2 + (1-label)*s^2  ==  s^2 - 2*l*s + l
            val = s * (s - 2.0 * l) + l
            # Row-level validity mask (cheap sublane iota + select on the VPU).
            row_ids = tile_row0 + r0 + lax.broadcasted_iota(
                jnp.int32, (chunk_rows, 1), 0)
            val = jnp.where(row_ids < data_rows, val, 0.0)
            # Fold chunk rows into an (8, 128) strip with pure vreg adds.
            return acc + jnp.sum(val.reshape(-1, SUBLANE, LANE), axis=0)

        acc0 = jnp.zeros((SUBLANE, LANE), jnp.float32)
        acc = lax.fori_loop(0, n_chunks, chunk_body, acc0, unroll=True)
        out_ref[...] += acc

    return kernel


def ls_loss(score: jax.Array, label) -> jax.Array:
    """Pallas implementation of the `ls` module forward pass."""
    label = jnp.asarray(label)
    scalar_label = (label.size == 1)

    if not scalar_label and label.shape != score.shape:
        # Rare non-scalar broadcast case: materialize (copy) as a fallback.
        score, label = jnp.broadcast_arrays(score, label)
    if not scalar_label and label.dtype == jnp.bool_:
        label = label.astype(jnp.float32)

    total_n = score.size
    s_flat = score.reshape(-1)
    if scalar_label:
        tiled_dtypes = (score.dtype,)
    else:
        l_flat = label.reshape(-1)
        tiled_dtypes = (score.dtype, label.dtype)

    min_item = min(jnp.dtype(d).itemsize for d in tiled_dtypes)
    max_item = max(jnp.dtype(d).itemsize for d in tiled_dtypes)
    # sublane packing: f32 -> 8 rows/vreg, bf16 -> 16, int8/fp8 -> 32
    row_mult = SUBLANE * max(1, 4 // max(1, min_item))

    # Pad only to the minimal row quantum (usually a no-op; at most
    # row_mult*128-1 extra elements).  No full-tile padding copies.
    quantum = LANE * row_mult
    padded_n = _round_up(total_n, quantum)
    pad = padded_n - total_n
    if pad:
        s_flat = jnp.pad(s_flat, (0, pad))
        if not scalar_label:
            l_flat = jnp.pad(l_flat, (0, pad))
    data_rows = padded_n // LANE

    # Byte-targeted tile size (f32: 8192 rows = 4 MiB per input buffer).
    max_tile_rows = max(row_mult,
                        (TARGET_TILE_BYTES // (LANE * max_item)) // row_mult * row_mult)
    tile_rows = min(data_rows, max_tile_rows)
    chunk_rows = _largest_divisor(tile_rows, row_mult, CHUNK_ROWS)

    tiles_needed = pl.cdiv(data_rows, tile_rows)
    nsplit = min(_num_tensorcores(), tiles_needed)
    tiles_per_core = pl.cdiv(tiles_needed, nsplit)
    last_tile = tiles_needed - 1

    if nsplit * tiles_per_core == tiles_needed:
        tile_map = lambda c, t: (c * tiles_per_core + t, 0)
    else:
        # Rounded-up duplicate tiles are clamped onto the last valid block;
        # the in-kernel row mask zeroes their contribution.
        tile_map = lambda c, t: (jnp.minimum(c * tiles_per_core + t, last_tile), 0)

    in_specs = [pl.BlockSpec((tile_rows, LANE), tile_map)]
    inputs = [s_flat.reshape(data_rows, LANE)]
    if scalar_label:
        lab_arr = jnp.asarray(label, jnp.float32).reshape(1)
        in_specs.append(pl.BlockSpec(memory_space=pltpu.MemorySpace.SMEM))
        inputs.append(lab_arr)
    else:
        in_specs.append(pl.BlockSpec((tile_rows, LANE), tile_map))
        inputs.append(l_flat.reshape(data_rows, LANE))

    if nsplit > 1:
        dims = (pltpu.CORE_PARALLEL, pltpu.ARBITRARY)   # both TCs stream HBM on v7x
    else:
        dims = ("arbitrary", "arbitrary")

    kernel = _make_kernel(tile_rows, chunk_rows, data_rows, tiles_per_core,
                          scalar_label)

    partials = pl.pallas_call(
        kernel,
        out_shape=jax.ShapeDtypeStruct((nsplit * SUBLANE, LANE), jnp.float32),
        grid_spec=pltpu.PrefetchScalarGridSpec(
            num_scalar_prefetch=0,
            grid=(nsplit, tiles_per_core),
            in_specs=in_specs,
            out_specs=pl.BlockSpec((SUBLANE, LANE), lambda c, t: (c, 0)),
        ),
        compiler_params=pltpu.CompilerParams(
            dimension_semantics=dims,
            vmem_limit_bytes=48 << 20,   # v5e default 16 MiB scoped is too tight
        ),
    )(*inputs)

    total = jnp.sum(partials)
    if scalar_label and pad:
        # Padded score elements are zero but the scalar label is not padded:
        # each contributes exactly `label` to s^2 - 2*l*s + l.  Correct exactly.
        total = total - jnp.asarray(label, jnp.float32).reshape(()) * pad
    return total * jnp.float32(1.0 / total_n)


if __name__ == "__main__":
    key = jax.random.PRNGKey(0)
    k1, k2 = jax.random.split(key)

    # small NCHW-like shapes: batch=2, channels=4, spatial=16x16 -> 2048 elems
    shape = (2, 4, 16, 16)
    score = jax.random.uniform(k1, shape, dtype=jnp.float32)
    label = (jax.random.uniform(k2, shape) > 0.5).astype(jnp.float32)

    # Array-label path (matches the module signature).
    loss = ls_loss(score, label)
    jax.block_until_ready(loss)
    ref = jnp.mean(label * (score - 1.0) ** 2 + (1.0 - label) * score ** 2)
    assert jnp.allclose(loss, ref, rtol=1e-5, atol=1e-6), (loss, ref)

    # Scalar-label fast path (typical GAN real/fake target).
    loss1 = ls_loss(score, jnp.float32(1.0))
    jax.block_until_ready(loss1)
    ref1 = jnp.mean((score - 1.0) ** 2)
    assert jnp.allclose(loss1, ref1, rtol=1e-5, atol=1e-6), (loss1, ref1)

    print("KERNEL_OK")
</pallas_src>

<mosaic_0001>
module attributes {stable_mosaic.version = 11 : i64} {
  func.func @kernel(%arg0: i32, %arg1: i32, %arg2: memref<16x128xf32, #tpu.memory_space<vmem>>, %arg3: memref<16x128xf32, #tpu.memory_space<vmem>>, %arg4: memref<8x128xf32, #tpu.memory_space<vmem>>) attributes {dimension_semantics = [#tpu.dimension_semantics<arbitrary>, #tpu.dimension_semantics<arbitrary>], iteration_bounds = array<i64: 1, 1>, scalar_prefetch = 0 : i64, scratch_operands = 0 : i64, tpu.core_type = #tpu.core_type<tc>, window_params = [{transform_indices = @transform_0, window_bounds = array<i64: 16, 128>}, {transform_indices = @transform_1, window_bounds = array<i64: 16, 128>}, {transform_indices = @transform_2, window_bounds = array<i64: 8, 128>}]} {
    %c0_i32 = arith.constant 0 : i32
    %0 = arith.cmpi eq, %arg1, %c0_i32 : i32
    %1 = arith.extui %0 : i1 to i32
    %c0_i32_0 = arith.constant 0 : i32
    %2 = arith.cmpi ne, %1, %c0_i32_0 : i32
    scf.if %2 {
      %cst_13 = arith.constant 0.000000e+00 : f32
      %34 = vector.broadcast %cst_13 : f32 to vector<8x128xf32>
      %c0_14 = arith.constant 0 : index
      %c0_15 = arith.constant 0 : index
      %35 = vector.load %arg4[%c0_14, %c0_15] : memref<8x128xf32, #tpu.memory_space<vmem>>, vector<8x128xf32>
      tpu.vector_store %arg4[%c0_14, %c0_15], %34 {strides = array<i32>} : memref<8x128xf32, #tpu.memory_space<vmem>>, vector<8x128xf32>,
    } else {
    }
    %c1_i32 = arith.constant 1 : i32
    %3 = arith.muli %arg0, %c1_i32 : i32
    %4 = arith.addi %3, %arg1 : i32
    %c16_i32 = arith.constant 16 : i32
    %5 = arith.muli %4, %c16_i32 : i32
    %cst = arith.constant 0.000000e+00 : f32
    %6 = vector.broadcast %cst : f32 to vector<8x128xf32>
    %c0_i32_1 = arith.constant 0 : i32
    %c16_i32_2 = arith.constant 16 : i32
    %7 = arith.muli %c0_i32_1, %c16_i32_2 : i32
    %8 = tpu.assume_multiple %7, 16 : i32
    %9 = arith.index_cast %8 : i32 to index
    %c0 = arith.constant 0 : index
    %10 = vector.load %arg2[%9, %c0] : memref<16x128xf32, #tpu.memory_space<vmem>>, vector<16x128xf32>
    %11 = arith.index_cast %8 : i32 to index
    %c0_3 = arith.constant 0 : index
    %12 = vector.load %arg3[%11, %c0_3] : memref<16x128xf32, #tpu.memory_space<vmem>>, vector<16x128xf32>
    %cst_4 = arith.constant 2.000000e+00 : f32
    %13 = vector.broadcast %cst_4 : f32 to vector<16x128xf32>
    %14 = arith.mulf %13, %12 : vector<16x128xf32>
    %15 = arith.subf %10, %14 : vector<16x128xf32>
    %16 = arith.mulf %10, %15 : vector<16x128xf32>
    %17 = arith.addf %16, %12 : vector<16x128xf32>
    %18 = arith.addi %5, %8 : i32
    %19 = tpu.iota {dimensions = array<i32: 0>} : vector<16x1xi32>
    %20 = vector.broadcast %18 : i32 to vector<16x1xi32>
    %21 = arith.addi %20, %19 : vector<16x1xi32>
    %c16_i32_5 = arith.constant 16 : i32
    %22 = vector.broadcast %c16_i32_5 : i32 to vector<16x1xi32>
    %23 = arith.cmpi slt, %21, %22 : vector<16x1xi32>
    %cst_6 = arith.constant 0.000000e+00 : f32
    %24 = vector.shape_cast %23 : vector<16x1xi1> to vector<16x1xi1>
    %25 = vector.broadcast %24 : vector<16x1xi1> to vector<16x128xi1>
    %26 = vector.broadcast %cst_6 : f32 to vector<16x128xf32>
    %27 = arith.select %25, %17, %26 : vector<16x128xi1>, vector<16x128xf32>
    %28 = vector.shape_cast %27 : vector<16x128xf32> to vector<2x8x128xf32>
    %cst_7 = arith.constant dense<0.000000e+00> : vector<8x128xf32>
    %29 = vector.multi_reduction <add>, %28, %cst_7 [0] : vector<2x8x128xf32> to vector<8x128xf32>
    %30 = arith.addf %6, %29 : vector<8x128xf32>
    %c1_i32_8 = arith.constant 1 : i32
    %c0_9 = arith.constant 0 : index
    %c0_10 = arith.constant 0 : index
    %31 = vector.load %arg4[%c0_9, %c0_10] : memref<8x128xf32, #tpu.memory_space<vmem>>, vector<8x128xf32>
    %32 = arith.addf %31, %30 : vector<8x128xf32>
    %c0_11 = arith.constant 0 : index
    %c0_12 = arith.constant 0 : index
    %33 = vector.load %arg4[%c0_11, %c0_12] : memref<8x128xf32, #tpu.memory_space<vmem>>, vector<8x128xf32>
    tpu.vector_store %arg4[%c0_11, %c0_12], %32 {strides = array<i32>} : memref<8x128xf32, #tpu.memory_space<vmem>>, vector<8x128xf32>,
    return
  }
  func.func @transform_0(%arg0: i32, %arg1: i32) -> (i32, i32) {
    %c1_i32 = arith.constant 1 : i32
    %0 = arith.muli %arg0, %c1_i32 : i32
    %1 = arith.addi %0, %arg1 : i32
    %c0_i32 = arith.constant 0 : i32
    %c0_i32_0 = arith.constant 0 : i32
    return %1, %c0_i32 : i32, i32
  }
  func.func @transform_1(%arg0: i32, %arg1: i32) -> (i32, i32) {
    %c1_i32 = arith.constant 1 : i32
    %0 = arith.muli %arg0, %c1_i32 : i32
    %1 = arith.addi %0, %arg1 : i32
    %c0_i32 = arith.constant 0 : i32
    %c0_i32_0 = arith.constant 0 : i32
    return %1, %c0_i32 : i32, i32
  }
  func.func @transform_2(%arg0: i32, %arg1: i32) -> (i32, i32) {
    %c0_i32 = arith.constant 0 : i32
    %c0_i32_0 = arith.constant 0 : i32
    return %arg0, %c0_i32 : i32, i32
  }
}

</mosaic_0001>

<llo_original>
// kernel: tpu_custom_call.1
$region0: #{tpu_custom_call.1}
  #allocation0 [shape = 'u32[]', space=smem, size = 0x4, offset = 0x4, fixed_abs, tag = 'smem constant byte address 0x4 - core index']
  #allocation1 [shape = 'u32[144,128]{1,0:T(1,128)}', space=vmem, size = 0x12000, scoped, tag = 'internal scratch']
  %s0 = inlined_call_operand.hbm [shape: f32[16,128], index: 0, kind: input, shape index: {}]
  %s1 = inlined_call_operand.hbm [shape: f32[16,128], index: 1, kind: input, shape index: {}]
  %s2 = inlined_call_operand.hbm [shape: f32[8,128], index: 2, kind: output, shape index: {}]
  %s3 = sld [smem:[#allocation0]]
  $region30: #{tpu_custom_call.1} parent=0
    _
  %s5 = ssub.s32 1, %s3
  %s6 = scalar_select 0, %s5, %s3
  $region1: #{tpu_custom_call.1} parent=0
    #allocation2 [shape = 'u8[8192]{0}', space=vmem, size = 0x2000, scoped, tag = 'input window, operand 0, single buffered']
    #allocation3 [shape = 's32[1]{0}', space=sflag, size = 0x4, scoped, tag = 'scoped memory for tpu_custom_call.1']
    #allocation4 [shape = 's32[1]{0}', space=sflag, size = 0x4, scoped, tag = 'scoped memory for tpu_custom_call.1']
    #allocation5 [shape = 'u8[8192]{0}', space=vmem, size = 0x2000, scoped, tag = 'input window, operand 1, single buffered']
    #allocation6 [shape = 's32[1]{0}', space=sflag, size = 0x4, scoped, tag = 'scoped memory for tpu_custom_call.1']
    #allocation7 [shape = 'u8[4096]{0}', space=vmem, size = 0x1000, scoped, tag = 'output window, operand 0, single buffered']
    %7 = vsyncpa [#allocation3], 0
    %8 = vsyncpa [#allocation6], 0
    %9 = vsyncpa [#allocation4], 0
    // Predicated region
    $region2: #{tpu_custom_call.1} parent=1 // pred_check
      _
    $region3: #{tpu_custom_call.1} parent=1 // pred_check_branch
      %11 = sbr.rel (0) target = $region5
    $region4: #{tpu_custom_call.1} parent=1 // pred_region
      %s12 = sadd.s32 0, 0
      %s13 = smul.u32 2, %s12
      %s15 = ssub.s32 256, 256
      %16 = vsyncadd [#allocation3], %s15
      %s17 = smul.addr %s13, 128
      %s18 = scalar_lea.hbm %s0, %s17
      %s19 = sshll.u32 [#allocation2], 4
      %s20 = int_to_ptr.vmem [resolvable:$true] %s19
      %25 = dma.hbm_to_vmem [thread:$0]  %s18, 256, %s20, [#allocation3], 128, 128, 8
    $region5: #{tpu_custom_call.1} parent=1 // pred_fallthru
      _
    // Predicated region
    $region6: #{tpu_custom_call.1} parent=1 // pred_check
      _
    $region7: #{tpu_custom_call.1} parent=1 // pred_check_branch
      %27 = sbr.rel (0) target = $region9
    $region8: #{tpu_custom_call.1} parent=1 // pred_region
      %s28 = sadd.s32 0, 0
      %s29 = smul.u32 2, %s28
      %s31 = ssub.s32 256, 256
      %32 = vsyncadd [#allocation6], %s31
      %s33 = smul.addr %s29, 128
      %s34 = scalar_lea.hbm %s1, %s33
      %s35 = sshll.u32 [#allocation5], 4
      %s36 = int_to_ptr.vmem [resolvable:$true] %s35
      %41 = dma.hbm_to_vmem [thread:$0]  %s34, 256, %s36, [#allocation6], 128, 128, 8
    $region9: #{tpu_custom_call.1} parent=1 // pred_fallthru
      _
    // Predicated region
    $region10: #{tpu_custom_call.1} parent=1 // pred_check
      _
    $region11: #{tpu_custom_call.1} parent=1 // pred_check_branch
      %43 = sbr.rel (0) target = $region13
    $region12: #{tpu_custom_call.1} parent=1 // pred_region
      %44 = dma.done [#allocation3], 256
    $region13: #{tpu_custom_call.1} parent=1 // pred_fallthru
      _
    // Predicated region
    $region14: #{tpu_custom_call.1} parent=1 // pred_check
      _
    $region15: #{tpu_custom_call.1} parent=1 // pred_check_branch
      %46 = sbr.rel (0) target = $region17
    $region16: #{tpu_custom_call.1} parent=1 // pred_region
      %47 = dma.done [#allocation6], 256
    $region17: #{tpu_custom_call.1} parent=1 // pred_fallthru
      _
    %s48 = sadd.s32 0, 0
    %s49 = smul.u32 2, %s48
    %s50 = sadd.s32 0, 0
    %s51 = smul.u32 2, %s50
    %p52 = scmp.eq.s32.totalorder 0, 0
    // Predicated region
    $region18: #{tpu_custom_call.1} parent=1 // pred_check
      %p53 = pneg %p52
    $region19: #{tpu_custom_call.1} parent=1 // pred_check_branch
      %55 = sbr.rel (%p53) target = $region21
    $region20: #{tpu_custom_call.1} parent=1 // pred_region
      %56 = vst [vmem:[#allocation7] sm:$0xff] 0.0
    $region21: #{tpu_custom_call.1} parent=1 // pred_fallthru
      _
    %s57 = sadd.s32 0, 0
    %s58 = smul.u32 %s57, 16
    %v59 = vld [vmem:[#allocation2] sm:$0xff]
    %v60 = vld [vmem:[#allocation2 + $0x8] sm:$0xff]
    %v61 = vld [vmem:[#allocation5] sm:$0xff]
    %v62 = vld [vmem:[#allocation5 + $0x8] sm:$0xff]
    %v63 = vmul.f32 %v61, 2.0
    %v64 = vmul.f32 %v62, 2.0
    %v65 = vsub.f32 %v59, %v63
    %v66 = vsub.f32 %v60, %v64
    %v67 = vmul.f32 %v59, %v65
    %v68 = vmul.f32 %v60, %v66
    %v69 = vadd.f32 %v67, %v61
    %v70 = vadd.f32 %v68, %v62
    %s71 = sadd.s32 %s58, 0
    %v72 = vlaneseq
    %v73 = vshrl.u32 %v72, 7
    %v74 = vadd.s32 %v73, 8
    %v75 = vstv %s71
    %v76 = vadd.s32 %v75, %v73
    %v77 = vadd.s32 %v75, %v74
    %vm78 = vcmp.lt.s32.totalorder %v76, 16
    %vm79 = vcmp.lt.s32.totalorder %v77, 16
    %v80 = vsel %vm78, 1, 0
    %v81 = vsel %vm79, 1, 0
    %vm82 = vcmp.eq.s32.totalorder %v80, 1
    %vm83 = vcmp.eq.s32.totalorder %v81, 1
    %v84 = vsel %vm82, %v69, 0.0
    %v85 = vsel %vm83, %v70, 0.0
    %v86 = vadd.f32 %v84, %v85
    %v87 = vadd.f32 %v86, 0.0
    %v88 = vld [vmem:[#allocation7] sm:$0xff]
    %v89 = vadd.f32 %v88, %v87
    %90 = vst [vmem:[#allocation7] sm:$0xff] %v89
    // Predicated region
    $region22: #{tpu_custom_call.1} parent=1 // pred_check
      _
    $region23: #{tpu_custom_call.1} parent=1 // pred_check_branch
      %92 = sbr.rel (0) target = $region25
    $region24: #{tpu_custom_call.1} parent=1 // pred_region
      %s94 = ssub.s32 128, 128
      %95 = vsyncadd [#allocation4], %s94
      %s97 = sshll.u32 [#allocation7], 4
      %s98 = int_to_ptr.vmem [resolvable:$true] %s97
      %100 = dma.vmem_to_hbm [thread:$0]  %s98, 128, %s2, [#allocation4]
    $region25: #{tpu_custom_call.1} parent=1 // pred_fallthru
      _
    // Predicated region
    $region26: #{tpu_custom_call.1} parent=1 // pred_check
      _
    $region27: #{tpu_custom_call.1} parent=1 // pred_check_branch
      %102 = sbr.rel (0) target = $region29
    $region28: #{tpu_custom_call.1} parent=1 // pred_region
      %103 = dma.done [#allocation4], 128
    $region29: #{tpu_custom_call.1} parent=1 // pred_fallthru
      _
    %104 = vsyncpa [#allocation3], 1
    %105 = vsyncpa [#allocation6], 1
    %106 = vsyncpa [#allocation4], 1

</llo_original>
